<compile_context>
chip_gen: v7x
topology: tpu7x:2x2x1
jax: 0.10.0
libtpu: 0.0.40
codegen_flags: <defaults>
</compile_context>

<pallas_src>
import functools

import jax
import jax.numpy as jnp
from jax.experimental import pallas as pl
from jax.experimental.pallas import tpu as pltpu


def _leaky(h):
    # LeakyReLU(0.01) in f32 on the VPU (v5e-safe): mul + max, no select.
    return jnp.maximum(h, 0.01 * h)


def _make_fused_critic_kernel(num_hidden_layers: int, fused_hidden: bool):
    """Kernel over one batch tile, feature-major (batch on the lane axis).

    fused_hidden=True  refs: x_t (D, TB), [W_l (out,in), b_l (out,1)] per fused
                       layer (layer 0, hidden block-diag layers, block-diag
                       head), out (2, TB).
    fused_hidden=False refs: x_t, W0/b0 (fused layer 0), then per hidden layer
                       W1,b1,W2,b2 (per-critic), then per-critic heads
                       Wh1,bh1,Wh2,bh2, out (2, TB).
    """
    num_linear = num_hidden_layers + 1

    if fused_hidden:
        def kernel(x_ref, *rest):
            out_ref = rest[-1]
            p = rest[:-1]
            w0 = p[0][...]
            b0 = p[1][...].astype(jnp.float32)
            x = x_ref[...].astype(w0.dtype)
            # (2H, D) @ (D, TB) -> (2H, TB), f32 accumulation on the MXU.
            h = jnp.dot(w0, x, preferred_element_type=jnp.float32) + b0
            idx = 2
            for _ in range(1, num_linear):
                h = _leaky(h)
                w = p[idx][...]
                b = p[idx + 1][...].astype(jnp.float32)
                h = jnp.dot(w, h.astype(w.dtype),
                            preferred_element_type=jnp.float32) + b
                idx += 2
            out_ref[...] = h.astype(out_ref.dtype)

        return kernel

    def kernel(x_ref, *rest):
        out_ref = rest[-1]
        p = rest[:-1]
        w0 = p[0][...]
        b0 = p[1][...].astype(jnp.float32)
        x = x_ref[...].astype(w0.dtype)
        h = jnp.dot(w0, x, preferred_element_type=jnp.float32) + b0
        half = w0.shape[0] // 2
        h1 = _leaky(h[:half])
        h2 = _leaky(h[half:])
        idx = 2
        for _ in range(num_hidden_layers - 1):  # per-critic hidden dots
            w1 = p[idx][...]
            b1 = p[idx + 1][...].astype(jnp.float32)
            w2 = p[idx + 2][...]
            b2 = p[idx + 3][...].astype(jnp.float32)
            h1 = _leaky(jnp.dot(w1, h1.astype(w1.dtype),
                                preferred_element_type=jnp.float32) + b1)
            h2 = _leaky(jnp.dot(w2, h2.astype(w2.dtype),
                                preferred_element_type=jnp.float32) + b2)
            idx += 4
        wh1 = p[idx][...]
        bh1 = p[idx + 1][...].astype(jnp.float32)
        wh2 = p[idx + 2][...]
        bh2 = p[idx + 3][...].astype(jnp.float32)
        q1 = jnp.dot(wh1, h1.astype(wh1.dtype),
                     preferred_element_type=jnp.float32) + bh1
        q2 = jnp.dot(wh2, h2.astype(wh2.dtype),
                     preferred_element_type=jnp.float32) + bh2
        out_ref[...] = jnp.concatenate([q1, q2], axis=0).astype(out_ref.dtype)

    return kernel


def init_double_critic_params(key, state_dim, action_dim, hidden_dim,
                              num_hidden_layers, dtype=jnp.float32):
    """Per-critic params mirroring nn.Linear shapes.

    Flat list [W, b, W, b, ...] for critic1 then critic2.  W is (in, out)
    (y = x @ W + b == nn.Linear(x)); b is (out,).
    """
    layers_dim = [state_dim + action_dim] + \
        [hidden_dim] * num_hidden_layers + [1]
    params = []
    for _critic in range(2):
        for ii in range(len(layers_dim) - 1):
            fan_in, fan_out = layers_dim[ii], layers_dim[ii + 1]
            key, kw, kb = jax.random.split(key, 3)
            bound = 1.0 / (fan_in ** 0.5)
            w = jax.random.uniform(kw, (fan_in, fan_out), dtype,
                                   minval=-bound, maxval=bound)
            b = jax.random.uniform(kb, (fan_out,), dtype,
                                   minval=-bound, maxval=bound)
            params += [w, b]
    return params


def fuse_double_critic_params(params, num_hidden_layers,
                              matmul_dtype=jnp.bfloat16,
                              max_fused_width=256):
    """Fuse the two critics for the feature-major kernel.

    Layer 0 is always fused (out-feature concat).  Hidden layers and the head
    are fused block-diagonally only while 2*hidden_dim <= max_fused_width
    (the MXU tile: 256 on v6e/v7x, pass 128 on v5e); otherwise they stay
    per-critic.  Weights are transposed to (out, in) and cast to matmul_dtype;
    biases stay f32 with shape (out, 1).

    Returns (fused_param_list, fused_hidden_flag).
    """
    num_linear = num_hidden_layers + 1
    per = 2 * num_linear
    c1, c2 = params[:per], params[per:]

    hidden_dim = c1[0].shape[1]
    fused_hidden = (num_linear == 1) or (2 * hidden_dim <= max_fused_width)

    fused = []
    # Layer 0: concat along out-features -> (D, 2*out0), transpose to (2*out0, D).
    w0 = jnp.concatenate([c1[0], c2[0]], axis=1)
    b0 = jnp.concatenate([c1[1], c2[1]], axis=0)
    fused.append(jnp.transpose(w0).astype(matmul_dtype))
    fused.append(b0.reshape(-1, 1).astype(jnp.float32))

    if fused_hidden:
        for l in range(1, num_linear):
            w1, b1 = c1[2 * l], c1[2 * l + 1]
            w2, b2 = c2[2 * l], c2[2 * l + 1]
            zero = jnp.zeros_like(w1)
            wb = jnp.concatenate(
                [jnp.concatenate([w1, zero], axis=1),
                 jnp.concatenate([zero, w2], axis=1)], axis=0)  # (2*in, 2*out)
            bb = jnp.concatenate([b1, b2], axis=0)
            fused.append(jnp.transpose(wb).astype(matmul_dtype))
            fused.append(bb.reshape(-1, 1).astype(jnp.float32))
        return fused, True

    # Per-critic hidden layers (and per-critic heads).
    for l in range(1, num_linear - 1):
        for c in (c1, c2):
            fused.append(jnp.transpose(c[2 * l]).astype(matmul_dtype))
            fused.append(c[2 * l + 1].reshape(-1, 1).astype(jnp.float32))
    lh = num_linear - 1
    for c in (c1, c2):
        fused.append(jnp.transpose(c[2 * lh]).astype(matmul_dtype))
        fused.append(c[2 * lh + 1].reshape(-1, 1).astype(jnp.float32))
    return fused, False


def _batch_tiling(batch):
    """Return (tile, padded_batch): 128-multiple tiles, >= 2 grid steps
    whenever batch >= 256 (so v7x can shard the grid across both TensorCores),
    tile capped at 4096 columns."""
    if batch <= 128:
        return 128, 128
    if batch < 256:
        tile = 128
    else:
        tile = min(4096, max(128, ((batch // 2) // 128) * 128))
    padded = ((batch + tile - 1) // tile) * tile
    return tile, padded


@functools.partial(jax.jit,
                   static_argnames=("num_hidden_layers", "fused_hidden"))
def double_critic_forward(state, action, fused_params, num_hidden_layers,
                          fused_hidden=True):
    """Pallas-backed forward of doubleCriticNetwork.

    state:  (B, stateDim) float32
    action: (B, actionDim) float32
    returns (B, 2) float32 = concat(critic1(x), critic2(x)), x = cat(state, action)
    """
    batch = state.shape[0]

    # Feature-major input: (Ds+Da, B_padded).  Layer 0 then contracts on the
    # sublane axis (no in-kernel transpose, lane-dense contiguous DMA rows).
    x_t = jnp.concatenate([state, action], axis=-1).T
    d = x_t.shape[0]
    tb, padded = _batch_tiling(batch)
    if padded != batch:
        x_t = jnp.pad(x_t, ((0, 0), (0, padded - batch)))

    kernel = _make_fused_critic_kernel(num_hidden_layers, fused_hidden)
    grid = (padded // tb,)

    def _resident(p):  # full-extent block, constant index -> stays in VMEM
        return pl.BlockSpec(p.shape, lambda i: (0, 0))

    in_specs = [pl.BlockSpec((d, tb), lambda i: (0, i))] + \
        [_resident(p) for p in fused_params]

    out_t = pl.pallas_call(
        kernel,
        out_shape=jax.ShapeDtypeStruct((2, padded), jnp.float32),
        grid=grid,
        in_specs=in_specs,
        out_specs=pl.BlockSpec((2, tb), lambda i: (0, i)),
        compiler_params=pltpu.CompilerParams(
            dimension_semantics=("parallel",)),
    )(x_t, *fused_params)
    # Back to the PyTorch (B, 2) layout (drop batch padding).
    return out_t[:, :batch].T


def _reference_forward(state, action, raw_params, num_hidden_layers):
    """Pure-JAX reference (two separate critics) for correctness checking."""
    x = jnp.concatenate([state, action], axis=-1)
    num_linear = num_hidden_layers + 1
    per = 2 * num_linear
    outs = []
    for c in range(2):
        pr = raw_params[c * per:(c + 1) * per]
        h = x
        for l in range(num_linear):
            h = h @ pr[2 * l] + pr[2 * l + 1]
            if l < num_linear - 1:
                h = jnp.where(h > 0, h, 0.01 * h)
        outs.append(h)
    return jnp.concatenate(outs, axis=-1)


if __name__ == "__main__":
    # Small, doubleCriticNetwork-consistent shapes.
    state_dim, action_dim = 12, 4
    hidden_dim, num_hidden_layers = 32, 2

    key = jax.random.PRNGKey(0)
    k_state, k_action, k_params, k_params_big = jax.random.split(key, 4)

    raw_params = init_double_critic_params(
        k_params, state_dim, action_dim, hidden_dim, num_hidden_layers)

    # --- small-batch f32 check (single grid step, fused block-diag hidden) ---
    batch = 8
    state = jax.random.normal(k_state, (batch, state_dim), jnp.float32)
    action = jax.random.normal(k_action, (batch, action_dim), jnp.float32)

    fused_f32, fh = fuse_double_critic_params(
        raw_params, num_hidden_layers, matmul_dtype=jnp.float32)
    assert fh, "expected fused hidden path for hidden_dim=32"
    out = double_critic_forward(state, action, fused_f32,
                                num_hidden_layers, fh)
    out = jax.block_until_ready(out)
    ref = _reference_forward(state, action, raw_params, num_hidden_layers)
    assert out.shape == (batch, 2), out.shape
    assert jnp.allclose(out, ref, atol=1e-5, rtol=1e-5), \
        "f32 mismatch vs reference"

    # --- non-128-multiple batch (padding + multi-step grid), bf16 weights ----
    batch2 = 300
    k_s2, k_a2 = jax.random.split(jax.random.PRNGKey(1))
    state2 = jax.random.normal(k_s2, (batch2, state_dim), jnp.float32)
    action2 = jax.random.normal(k_a2, (batch2, action_dim), jnp.float32)

    fused_bf16, fh2 = fuse_double_critic_params(
        raw_params, num_hidden_layers, matmul_dtype=jnp.bfloat16)
    out2 = jax.block_until_ready(double_critic_forward(
        state2, action2, fused_bf16, num_hidden_layers, fh2))
    ref2 = _reference_forward(state2, action2, raw_params, num_hidden_layers)
    assert out2.shape == (batch2, 2), out2.shape
    assert jnp.allclose(out2, ref2, atol=2e-1, rtol=1e-1), \
        "bf16 mismatch vs reference"

    # --- wide hidden (2H > 256): per-critic hidden dots (unfused gate) -------
    hidden_big = 256
    raw_big = init_double_critic_params(
        k_params_big, state_dim, action_dim, hidden_big, num_hidden_layers)
    fused_big, fh3 = fuse_double_critic_params(
        raw_big, num_hidden_layers, matmul_dtype=jnp.float32)
    assert not fh3, "expected per-critic hidden path for hidden_dim=256"
    batch3 = 64
    k_s3, k_a3 = jax.random.split(jax.random.PRNGKey(2))
    state3 = jax.random.normal(k_s3, (batch3, state_dim), jnp.float32)
    action3 = jax.random.normal(k_a3, (batch3, action_dim), jnp.float32)
    out3 = jax.block_until_ready(double_critic_forward(
        state3, action3, fused_big, num_hidden_layers, fh3))
    ref3 = _reference_forward(state3, action3, raw_big, num_hidden_layers)
    assert out3.shape == (batch3, 2), out3.shape
    assert jnp.allclose(out3, ref3, atol=1e-4, rtol=1e-4), \
        "wide-hidden f32 mismatch vs reference"

    # TODO(synk): doubleCriticNetwork.save (torch.save) is host-side I/O, not a kernel.
    print("KERNEL_OK")
</pallas_src>

<mosaic_0001>
module attributes {stable_mosaic.version = 11 : i64} {
  func.func @kernel(%arg0: i32, %arg1: memref<16x128xf32, #tpu.memory_space<vmem>>, %arg2: memref<64x16xf32, #tpu.memory_space<vmem>>, %arg3: memref<64x1xf32, #tpu.memory_space<vmem>>, %arg4: memref<64x64xf32, #tpu.memory_space<vmem>>, %arg5: memref<64x1xf32, #tpu.memory_space<vmem>>, %arg6: memref<2x64xf32, #tpu.memory_space<vmem>>, %arg7: memref<2x1xf32, #tpu.memory_space<vmem>>, %arg8: memref<2x128xf32, #tpu.memory_space<vmem>>) attributes {dimension_semantics = [#tpu.dimension_semantics<parallel>], iteration_bounds = array<i64: 1>, scalar_prefetch = 0 : i64, scratch_operands = 0 : i64, tpu.core_type = #tpu.core_type<tc>, window_params = [{transform_indices = @transform_0, window_bounds = array<i64: 16, 128>}, {pipeline_mode = #tpu.pipeline_mode<synchronous>, transform_indices = @transform_1, window_bounds = array<i64: 64, 16>}, {pipeline_mode = #tpu.pipeline_mode<synchronous>, transform_indices = @transform_2, window_bounds = array<i64: 64, 1>}, {pipeline_mode = #tpu.pipeline_mode<synchronous>, transform_indices = @transform_3, window_bounds = array<i64: 64, 64>}, {pipeline_mode = #tpu.pipeline_mode<synchronous>, transform_indices = @transform_4, window_bounds = array<i64: 64, 1>}, {pipeline_mode = #tpu.pipeline_mode<synchronous>, transform_indices = @transform_5, window_bounds = array<i64: 2, 64>}, {pipeline_mode = #tpu.pipeline_mode<synchronous>, transform_indices = @transform_6, window_bounds = array<i64: 2, 1>}, {transform_indices = @transform_7, window_bounds = array<i64: 2, 128>}]} {
    %c0 = arith.constant 0 : index
    %c0_0 = arith.constant 0 : index
    %0 = vector.load %arg2[%c0, %c0_0] : memref<64x16xf32, #tpu.memory_space<vmem>>, vector<64x16xf32>
    %c0_1 = arith.constant 0 : index
    %c0_2 = arith.constant 0 : index
    %1 = vector.load %arg3[%c0_1, %c0_2] : memref<64x1xf32, #tpu.memory_space<vmem>>, vector<64x1xf32>
    %c0_3 = arith.constant 0 : index
    %c0_4 = arith.constant 0 : index
    %2 = vector.load %arg1[%c0_3, %c0_4] : memref<16x128xf32, #tpu.memory_space<vmem>>, vector<16x128xf32>
    %cst = arith.constant dense<0.000000e+00> : vector<64x128xf32>
    %3 = tpu.matmul %0, %2, %cst {dimension_numbers = #tpu.dot_dimension_numbers<[1], [0], [0], [1], [0, 0, 1, 1], [], []>} : vector<64x16xf32>, vector<16x128xf32>, vector<64x128xf32> -> vector<64x128xf32>
    %4 = vector.broadcast %1 : vector<64x1xf32> to vector<64x128xf32>
    %5 = arith.addf %3, %4 : vector<64x128xf32>
    %cst_5 = arith.constant 0.00999999977 : f32
    %6 = vector.broadcast %cst_5 : f32 to vector<64x128xf32>
    %7 = arith.mulf %6, %5 : vector<64x128xf32>
    %8 = arith.maximumf %5, %7 : vector<64x128xf32>
    %c0_6 = arith.constant 0 : index
    %c0_7 = arith.constant 0 : index
    %9 = vector.load %arg4[%c0_6, %c0_7] : memref<64x64xf32, #tpu.memory_space<vmem>>, vector<64x64xf32>
    %c0_8 = arith.constant 0 : index
    %c0_9 = arith.constant 0 : index
    %10 = vector.load %arg5[%c0_8, %c0_9] : memref<64x1xf32, #tpu.memory_space<vmem>>, vector<64x1xf32>
    %cst_10 = arith.constant dense<0.000000e+00> : vector<64x128xf32>
    %11 = tpu.matmul %9, %8, %cst_10 {dimension_numbers = #tpu.dot_dimension_numbers<[1], [0], [0], [1], [0, 0, 1, 1], [], []>} : vector<64x64xf32>, vector<64x128xf32>, vector<64x128xf32> -> vector<64x128xf32>
    %12 = vector.broadcast %10 : vector<64x1xf32> to vector<64x128xf32>
    %13 = arith.addf %11, %12 : vector<64x128xf32>
    %cst_11 = arith.constant 0.00999999977 : f32
    %14 = vector.broadcast %cst_11 : f32 to vector<64x128xf32>
    %15 = arith.mulf %14, %13 : vector<64x128xf32>
    %16 = arith.maximumf %13, %15 : vector<64x128xf32>
    %c0_12 = arith.constant 0 : index
    %c0_13 = arith.constant 0 : index
    %17 = vector.load %arg6[%c0_12, %c0_13] : memref<2x64xf32, #tpu.memory_space<vmem>>, vector<2x64xf32>
    %c0_14 = arith.constant 0 : index
    %c0_15 = arith.constant 0 : index
    %18 = vector.load %arg7[%c0_14, %c0_15] : memref<2x1xf32, #tpu.memory_space<vmem>>, vector<2x1xf32>
    %cst_16 = arith.constant dense<0.000000e+00> : vector<2x128xf32>
    %19 = tpu.matmul %17, %16, %cst_16 {dimension_numbers = #tpu.dot_dimension_numbers<[1], [0], [0], [1], [0, 0, 1, 1], [], []>} : vector<2x64xf32>, vector<64x128xf32>, vector<2x128xf32> -> vector<2x128xf32>
    %20 = vector.broadcast %18 : vector<2x1xf32> to vector<2x128xf32>
    %21 = arith.addf %19, %20 : vector<2x128xf32>
    %c0_17 = arith.constant 0 : index
    %c0_18 = arith.constant 0 : index
    %22 = vector.load %arg8[%c0_17, %c0_18] : memref<2x128xf32, #tpu.memory_space<vmem>>, vector<2x128xf32>
    tpu.vector_store %arg8[%c0_17, %c0_18], %21 {strides = array<i32>} : memref<2x128xf32, #tpu.memory_space<vmem>>, vector<2x128xf32>,
    return
  }
  func.func @transform_0(%arg0: i32) -> (i32, i32) {
    %c0_i32 = arith.constant 0 : i32
    %c0_i32_0 = arith.constant 0 : i32
    return %c0_i32, %arg0 : i32, i32
  }
  func.func @transform_1(%arg0: i32) -> (i32, i32) {
    %c0_i32 = arith.constant 0 : i32
    %c0_i32_0 = arith.constant 0 : i32
    %c0_i32_1 = arith.constant 0 : i32
    return %c0_i32, %c0_i32_0 : i32, i32
  }
  func.func @transform_2(%arg0: i32) -> (i32, i32) {
    %c0_i32 = arith.constant 0 : i32
    %c0_i32_0 = arith.constant 0 : i32
    %c0_i32_1 = arith.constant 0 : i32
    return %c0_i32, %c0_i32_0 : i32, i32
  }
  func.func @transform_3(%arg0: i32) -> (i32, i32) {
    %c0_i32 = arith.constant 0 : i32
    %c0_i32_0 = arith.constant 0 : i32
    %c0_i32_1 = arith.constant 0 : i32
    return %c0_i32, %c0_i32_0 : i32, i32
  }
  func.func @transform_4(%arg0: i32) -> (i32, i32) {
    %c0_i32 = arith.constant 0 : i32
    %c0_i32_0 = arith.constant 0 : i32
    %c0_i32_1 = arith.constant 0 : i32
    return %c0_i32, %c0_i32_0 : i32, i32
  }
  func.func @transform_5(%arg0: i32) -> (i32, i32) {
    %c0_i32 = arith.constant 0 : i32
    %c0_i32_0 = arith.constant 0 : i32
    %c0_i32_1 = arith.constant 0 : i32
    return %c0_i32, %c0_i32_0 : i32, i32
  }
  func.func @transform_6(%arg0: i32) -> (i32, i32) {
    %c0_i32 = arith.constant 0 : i32
    %c0_i32_0 = arith.constant 0 : i32
    %c0_i32_1 = arith.constant 0 : i32
    return %c0_i32, %c0_i32_0 : i32, i32
  }
  func.func @transform_7(%arg0: i32) -> (i32, i32) {
    %c0_i32 = arith.constant 0 : i32
    %c0_i32_0 = arith.constant 0 : i32
    return %c0_i32, %arg0 : i32, i32
  }
}

</mosaic_0001>

<llo_original>
// kernel: double_critic_forward.1
$region0: #{double_critic_forward.1}
  #allocation0 [shape = 'u32[]', space=smem, size = 0x4, offset = 0x4, fixed_abs, tag = 'smem constant byte address 0x4 - core index']
  #allocation1 [shape = 'u32[144,128]{1,0:T(1,128)}', space=vmem, size = 0x12000, scoped, tag = 'internal scratch']
  %s0 = inlined_call_operand.vmem [shape: f32[16,128], index: 0, kind: input, shape index: {}]
  %s1 = inlined_call_operand.vmem [shape: f32[64,16], index: 1, kind: input, shape index: {}]
  %s2 = inlined_call_operand.vmem [shape: f32[64,1], index: 2, kind: input, shape index: {}]
  %s3 = inlined_call_operand.vmem [shape: f32[64,64], index: 3, kind: input, shape index: {}]
  %s4 = inlined_call_operand.vmem [shape: f32[64,1], index: 4, kind: input, shape index: {}]
  %s5 = inlined_call_operand.vmem [shape: f32[2,64], index: 5, kind: input, shape index: {}]
  %s6 = inlined_call_operand.vmem [shape: f32[2,1], index: 6, kind: input, shape index: {}]
  %s7 = inlined_call_operand.vmem [shape: f32[2,128], index: 7, kind: output, shape index: {}]
  %s8 = sld [smem:[#allocation0]]
  $region38: #{double_critic_forward.1} parent=0
    _
  %s10 = ssub.s32 1, %s8
  %s11 = scalar_select 0, %s10, %s8
  // Predicated region
  $region2: #{double_critic_forward.1} parent=0 // pred_check
    _
  $region3: #{double_critic_forward.1} parent=0 // pred_check_branch
    %13 = sbr.rel (0) target = $region5
  $region4: #{double_critic_forward.1} parent=0 // pred_region
    _
  $region5: #{double_critic_forward.1} parent=0 // pred_fallthru
    _
  // Predicated region
  $region6: #{double_critic_forward.1} parent=0 // pred_check
    _
  $region7: #{double_critic_forward.1} parent=0 // pred_check_branch
    %15 = sbr.rel (0) target = $region9
  $region8: #{double_critic_forward.1} parent=0 // pred_region
    _
  $region9: #{double_critic_forward.1} parent=0 // pred_fallthru
    _
  // Predicated region
  $region10: #{double_critic_forward.1} parent=0 // pred_check
    _
  $region11: #{double_critic_forward.1} parent=0 // pred_check_branch
    %17 = sbr.rel (0) target = $region13
  $region12: #{double_critic_forward.1} parent=0 // pred_region
    _
  $region13: #{double_critic_forward.1} parent=0 // pred_fallthru
    _
  // Predicated region
  $region14: #{double_critic_forward.1} parent=0 // pred_check
    _
  $region15: #{double_critic_forward.1} parent=0 // pred_check_branch
    %19 = sbr.rel (0) target = $region17
  $region16: #{double_critic_forward.1} parent=0 // pred_region
    _
  $region17: #{double_critic_forward.1} parent=0 // pred_fallthru
    _
  // Predicated region
  $region18: #{double_critic_forward.1} parent=0 // pred_check
    _
  $region19: #{double_critic_forward.1} parent=0 // pred_check_branch
    %21 = sbr.rel (0) target = $region21
  $region20: #{double_critic_forward.1} parent=0 // pred_region
    _
  $region21: #{double_critic_forward.1} parent=0 // pred_fallthru
    _
  // Predicated region
  $region22: #{double_critic_forward.1} parent=0 // pred_check
    _
  $region23: #{double_critic_forward.1} parent=0 // pred_check_branch
    %23 = sbr.rel (0) target = $region25
  $region24: #{double_critic_forward.1} parent=0 // pred_region
    _
  $region25: #{double_critic_forward.1} parent=0 // pred_fallthru
    _
  // Predicated region
  $region26: #{double_critic_forward.1} parent=0 // pred_check
    _
  $region27: #{double_critic_forward.1} parent=0 // pred_check_branch
    %25 = sbr.rel (0) target = $region29
  $region28: #{double_critic_forward.1} parent=0 // pred_region
    _
  $region29: #{double_critic_forward.1} parent=0 // pred_fallthru
    _
  %v26 = vld [vmem:[%s1] sm:$0xff]
  %v27 = vld [vmem:[%s1 + $0x8] sm:$0xff]
  %v28 = vld [vmem:[%s1 + $0x10] sm:$0xff]
  %v29 = vld [vmem:[%s1 + $0x18] sm:$0xff]
  %v30 = vld [vmem:[%s1 + $0x20] sm:$0xff]
  %v31 = vld [vmem:[%s1 + $0x28] sm:$0xff]
  %v32 = vld [vmem:[%s1 + $0x30] sm:$0xff]
  %v33 = vld [vmem:[%s1 + $0x38] sm:$0xff]
  %v34 = vld [vmem:[%s2] sm:$0xff]
  %v35 = vld [vmem:[%s2 + $0x8] sm:$0xff]
  %v36 = vld [vmem:[%s2 + $0x10] sm:$0xff]
  %v37 = vld [vmem:[%s2 + $0x18] sm:$0xff]
  %v38 = vld [vmem:[%s2 + $0x20] sm:$0xff]
  %v39 = vld [vmem:[%s2 + $0x28] sm:$0xff]
  %v40 = vld [vmem:[%s2 + $0x30] sm:$0xff]
  %v41 = vld [vmem:[%s2 + $0x38] sm:$0xff]
  %v42 = vld [vmem:[%s0] sm:$0xff]
  %v43 = vld [vmem:[%s0 + $0x8] sm:$0xff]
  %45 = vset.pattern.permute.xlu0 0
  %46 = vperm.xlu0 %45, %v34
  %v47 = vpop.permute.xlu0 %46
  %50 = vset.pattern.permute.xlu0 0
  %51 = vperm.xlu0 %50, %v35
  %v52 = vpop.permute.xlu0 %51
  %55 = vset.pattern.permute.xlu0 0
  %56 = vperm.xlu0 %55, %v36
  %v57 = vpop.permute.xlu0 %56
  %60 = vset.pattern.permute.xlu0 0
  %61 = vperm.xlu0 %60, %v37
  %v62 = vpop.permute.xlu0 %61
  %65 = vset.pattern.permute.xlu0 0
  %66 = vperm.xlu0 %65, %v38
  %v67 = vpop.permute.xlu0 %66
  %70 = vset.pattern.permute.xlu0 0
  %71 = vperm.xlu0 %70, %v39
  %v72 = vpop.permute.xlu0 %71
  %75 = vset.pattern.permute.xlu0 0
  %76 = vperm.xlu0 %75, %v40
  %v77 = vpop.permute.xlu0 %76
  %80 = vset.pattern.permute.xlu0 0
  %81 = vperm.xlu0 %80, %v41
  %v82 = vpop.permute.xlu0 %81
  %vm84 = vcmask 130048
  %v86 = vsel %vm84, %v26, 0
  %v89 = vsel %vm84, %v27, 0
  %v92 = vsel %vm84, %v28, 0
  %v95 = vsel %vm84, %v29, 0
  %v98 = vsel %vm84, %v30, 0
  %v101 = vsel %vm84, %v31, 0
  %v104 = vsel %vm84, %v32, 0
  %v107 = vsel %vm84, %v33, 0
  %109 = vmatprep.subr.mxu0 0.0
  %110 = vmatpush1.msra.mxu0 %v42
  %111 = vmatprep.subr.mxu0 0.0
  %112 = vmatpush1.msra.mxu0 %v43
  %113 = vmatprep.subr.mxu0 0.0
  %114 = vmatpush1.msra.mxu0 0.0
  %115 = vmatprep.subr.mxu0 0.0
  %116 = vmatpush1.msra.mxu0 0.0
  %117 = vmatprep.subr.mxu0 0.0
  %118 = vmatpush1.msra.mxu0 0.0
  %119 = vmatprep.subr.mxu0 0.0
  %120 = vmatpush1.msra.mxu0 0.0
  %121 = vmatprep.subr.mxu0 0.0
  %122 = vmatpush1.msra.mxu0 0.0
  %123 = vmatprep.subr.mxu0 0.0
  %124 = vmatpush1.msra.mxu0 0.0
  %125 = vmatprep.subr.mxu0 0.0
  %126 = vmatpush1.msra.mxu0 0.0
  %127 = vmatprep.subr.mxu0 0.0
  %128 = vmatpush1.msra.mxu0 0.0
  %129 = vmatprep.subr.mxu0 0.0
  %130 = vmatpush1.msra.mxu0 0.0
  %131 = vmatprep.subr.mxu0 0.0
  %132 = vmatpush1.msra.mxu0 0.0
  %133 = vmatprep.subr.mxu0 0.0
  %134 = vmatpush1.msra.mxu0 0.0
  %135 = vmatprep.subr.mxu0 0.0
  %136 = vmatpush1.msra.mxu0 0.0
  %137 = vmatprep.subr.mxu0 0.0
  %138 = vmatpush1.msra.mxu0 0.0
  %139 = vmatprep.subr.mxu0 0.0
  %140 = vmatpush1.msra.mxu0 0.0
  %141 = vmatprep.subr.mxu0 0.0
  %142 = vmatpush1.msra.mxu0 0.0
  %143 = vmatprep.subr.mxu0 0.0
  %144 = vmatpush1.msra.mxu0 0.0
  %145 = vmatprep.subr.mxu0 0.0
  %146 = vmatpush1.msra.mxu0 0.0
  %147 = vmatprep.subr.mxu0 0.0
  %148 = vmatpush1.msra.mxu0 0.0
  %149 = vmatprep.subr.mxu0 0.0
  %150 = vmatpush1.msra.mxu0 0.0
  %151 = vmatprep.subr.mxu0 0.0
  %152 = vmatpush1.msra.mxu0 0.0
  %153 = vmatprep.subr.mxu0 0.0
  %154 = vmatpush1.msra.mxu0 0.0
  %155 = vmatprep.subr.mxu0 0.0
  %156 = vmatpush1.msra.mxu0 0.0
  %157 = vmatprep.subr.mxu0 0.0
  %158 = vmatpush1.msra.mxu0 0.0
  %159 = vmatprep.subr.mxu0 0.0
  %160 = vmatpush1.msra.mxu0 0.0
  %161 = vmatprep.subr.mxu0 0.0
  %162 = vmatpush1.msra.mxu0 0.0
  %163 = vmatprep.subr.mxu0 0.0
  %164 = vmatpush1.msra.mxu0 0.0
  %165 = vmatprep.subr.mxu0 0.0
  %166 = vmatpush1.msra.mxu0 0.0
  %167 = vmatprep.subr.mxu0 0.0
  %168 = vmatpush1.msra.mxu0 0.0
  %169 = vmatprep.subr.mxu0 0.0
  %170 = vmatpush1.msra.mxu0 0.0
  %171 = vmatprep.subr.mxu0 0.0
  %172 = vmatpush1.msra.mxu0 0.0
  %173 = vmatprep.mubr.f32.mxu0 0.0
  %174 = vmatmul.mubr.f32.gmra.mrb[0].mxu0 %v86
  %v175 = vpop.f32.mrb[0].mxu0
  %v176 = vadd.f32 %v47, %v175
  %v177 = vpop.f32.mrb[0].mxu0
  %178 = vmatprep.mubr.f32.mxu0 0.0
  %179 = vmatmul.mubr.f32.gmra.mrb[0].mxu0 %v89
  %v180 = vpop.f32.mrb[0].mxu0
  %v181 = vadd.f32 %v52, %v180
  %v182 = vpop.f32.mrb[0].mxu0
  %183 = vmatprep.mubr.f32.mxu0 0.0
  %184 = vmatmul.mubr.f32.gmra.mrb[0].mxu0 %v92
  %v185 = vpop.f32.mrb[0].mxu0
  %v186 = vadd.f32 %v57, %v185
  %v187 = vpop.f32.mrb[0].mxu0
  %188 = vmatprep.mubr.f32.mxu0 0.0
  %189 = vmatmul.mubr.f32.gmra.mrb[0].mxu0 %v95
  %v190 = vpop.f32.mrb[0].mxu0
  %v191 = vadd.f32 %v62, %v190
  %v192 = vpop.f32.mrb[0].mxu0
  %193 = vmatprep.mubr.f32.mxu0 0.0
  %194 = vmatmul.mubr.f32.gmra.mrb[0].mxu0 %v98
  %v195 = vpop.f32.mrb[0].mxu0
  %v196 = vadd.f32 %v67, %v195
  %v197 = vpop.f32.mrb[0].mxu0
  %198 = vmatprep.mubr.f32.mxu0 0.0
  %199 = vmatmul.mubr.f32.gmra.mrb[0].mxu0 %v101
  %v200 = vpop.f32.mrb[0].mxu0
  %v201 = vadd.f32 %v72, %v200
  %v202 = vpop.f32.mrb[0].mxu0
  %203 = vmatprep.mubr.f32.mxu0 0.0
  %204 = vmatmul.mubr.f32.gmra.mrb[0].mxu0 %v104
  %v205 = vpop.f32.mrb[0].mxu0
  %v206 = vadd.f32 %v77, %v205
  %v207 = vpop.f32.mrb[0].mxu0
  %208 = vmatprep.mubr.f32.mxu0 0.0
  %209 = vmatmul.mubr.f32.gmra.mrb[0].mxu0 %v107
  %v210 = vpop.f32.mrb[0].mxu0
  %v211 = vadd.f32 %v82, %v210
  %v212 = vpop.f32.mrb[0].mxu0
  %213 = vdwg.mxu0
  %v214 = vmul.f32 %v176, 0.01
  %v215 = vmul.f32 %v181, 0.01
  %v216 = vmul.f32 %v186, 0.01
  %v217 = vmul.f32 %v191, 0.01
  %v218 = vmul.f32 %v196, 0.01
  %v219 = vmul.f32 %v201, 0.01
  %v220 = vmul.f32 %v206, 0.01
  %v221 = vmul.f32 %v211, 0.01
  %v222 = vmax.f32 %v176, %v214
  %v223 = vmax.f32 %v181, %v215
  %v224 = vmax.f32 %v186, %v216
  %v225 = vmax.f32 %v191, %v217
  %v226 = vmax.f32 %v196, %v218
  %v227 = vmax.f32 %v201, %v219
  %v228 = vmax.f32 %v206, %v220
  %v229 = vmax.f32 %v211, %v221
  %v230 = vld [vmem:[%s3] sm:$0xff]
  %v231 = vld [vmem:[%s3 + $0x8] sm:$0xff]
  %v232 = vld [vmem:[%s3 + $0x10] sm:$0xff]
  %v233 = vld [vmem:[%s3 + $0x18] sm:$0xff]
  %v234 = vld [vmem:[%s3 + $0x20] sm:$0xff]
  %v235 = vld [vmem:[%s3 + $0x28] sm:$0xff]
  %v236 = vld [vmem:[%s3 + $0x30] sm:$0xff]
  %v237 = vld [vmem:[%s3 + $0x38] sm:$0xff]
  %v238 = vld [vmem:[%s4] sm:$0xff]
  %v239 = vld [vmem:[%s4 + $0x8] sm:$0xff]
  %v240 = vld [vmem:[%s4 + $0x10] sm:$0xff]
  %v241 = vld [vmem:[%s4 + $0x18] sm:$0xff]
  %v242 = vld [vmem:[%s4 + $0x20] sm:$0xff]
  %v243 = vld [vmem:[%s4 + $0x28] sm:$0xff]
  %v244 = vld [vmem:[%s4 + $0x30] sm:$0xff]
  %v245 = vld [vmem:[%s4 + $0x38] sm:$0xff]
  %247 = vset.pattern.permute.xlu0 0
  %248 = vperm.xlu0 %247, %v238
  %v249 = vpop.permute.xlu0 %248
  %252 = vset.pattern.permute.xlu0 0
  %253 = vperm.xlu0 %252, %v239
  %v254 = vpop.permute.xlu0 %253
  %257 = vset.pattern.permute.xlu0 0
  %258 = vperm.xlu0 %257, %v240
  %v259 = vpop.permute.xlu0 %258
  %262 = vset.pattern.permute.xlu0 0
  %263 = vperm.xlu0 %262, %v241
  %v264 = vpop.permute.xlu0 %263
  %267 = vset.pattern.permute.xlu0 0
  %268 = vperm.xlu0 %267, %v242
  %v269 = vpop.permute.xlu0 %268
  %272 = vset.pattern.permute.xlu0 0
  %273 = vperm.xlu0 %272, %v243
  %v274 = vpop.permute.xlu0 %273
  %277 = vset.pattern.permute.xlu0 0
  %278 = vperm.xlu0 %277, %v244
  %v279 = vpop.permute.xlu0 %278
  %282 = vset.pattern.permute.xlu0 0
  %283 = vperm.xlu0 %282, %v245
  %v284 = vpop.permute.xlu0 %283
  %vm286 = vcmask 523264
  %v288 = vsel %vm286, %v230, 0
  %v291 = vsel %vm286, %v231, 0
  %v294 = vsel %vm286, %v232, 0
  %v297 = vsel %vm286, %v233, 0
  %v300 = vsel %vm286, %v234, 0
  %v303 = vsel %vm286, %v235, 0
  %v306 = vsel %vm286, %v236, 0
  %v309 = vsel %vm286, %v237, 0
  %311 = vmatprep.subr.mxu0 0.0
  %312 = vmatpush1.msra.mxu0 %v222
  %313 = vmatprep.subr.mxu0 0.0
  %314 = vmatpush1.msra.mxu0 %v223
  %315 = vmatprep.subr.mxu0 0.0
  %316 = vmatpush1.msra.mxu0 %v224
  %317 = vmatprep.subr.mxu0 0.0
  %318 = vmatpush1.msra.mxu0 %v225
  %319 = vmatprep.subr.mxu0 0.0
  %320 = vmatpush1.msra.mxu0 %v226
  %321 = vmatprep.subr.mxu0 0.0
  %322 = vmatpush1.msra.mxu0 %v227
  %323 = vmatprep.subr.mxu0 0.0
  %324 = vmatpush1.msra.mxu0 %v228
  %325 = vmatprep.subr.mxu0 0.0
  %326 = vmatpush1.msra.mxu0 %v229
  %327 = vmatprep.subr.mxu0 0.0
  %328 = vmatpush1.msra.mxu0 0.0
  %329 = vmatprep.subr.mxu0 0.0
  %330 = vmatpush1.msra.mxu0 0.0
  %331 = vmatprep.subr.mxu0 0.0
  %332 = vmatpush1.msra.mxu0 0.0
  %333 = vmatprep.subr.mxu0 0.0
  %334 = vmatpush1.msra.mxu0 0.0
  %335 = vmatprep.subr.mxu0 0.0
  %336 = vmatpush1.msra.mxu0 0.0
  %337 = vmatprep.subr.mxu0 0.0
  %338 = vmatpush1.msra.mxu0 0.0
  %339 = vmatprep.subr.mxu0 0.0
  %340 = vmatpush1.msra.mxu0 0.0
  %341 = vmatprep.subr.mxu0 0.0
  %342 = vmatpush1.msra.mxu0 0.0
  %343 = vmatprep.subr.mxu0 0.0
  %344 = vmatpush1.msra.mxu0 0.0
  %345 = vmatprep.subr.mxu0 0.0
  %346 = vmatpush1.msra.mxu0 0.0
  %347 = vmatprep.subr.mxu0 0.0
  %348 = vmatpush1.msra.mxu0 0.0
  %349 = vmatprep.subr.mxu0 0.0
  %350 = vmatpush1.msra.mxu0 0.0
  %351 = vmatprep.subr.mxu0 0.0
  %352 = vmatpush1.msra.mxu0 0.0
  %353 = vmatprep.subr.mxu0 0.0
  %354 = vmatpush1.msra.mxu0 0.0
  %355 = vmatprep.subr.mxu0 0.0
  %356 = vmatpush1.msra.mxu0 0.0
  %357 = vmatprep.subr.mxu0 0.0
  %358 = vmatpush1.msra.mxu0 0.0
  %359 = vmatprep.subr.mxu0 0.0
  %360 = vmatpush1.msra.mxu0 0.0
  %361 = vmatprep.subr.mxu0 0.0
  %362 = vmatpush1.msra.mxu0 0.0
  %363 = vmatprep.subr.mxu0 0.0
  %364 = vmatpush1.msra.mxu0 0.0
  %365 = vmatprep.subr.mxu0 0.0
  %366 = vmatpush1.msra.mxu0 0.0
  %367 = vmatprep.subr.mxu0 0.0
  %368 = vmatpush1.msra.mxu0 0.0
  %369 = vmatprep.subr.mxu0 0.0
  %370 = vmatpush1.msra.mxu0 0.0
  %371 = vmatprep.subr.mxu0 0.0
  %372 = vmatpush1.msra.mxu0 0.0
  %373 = vmatprep.subr.mxu0 0.0
  %374 = vmatpush1.msra.mxu0 0.0
  %375 = vmatprep.mubr.f32.mxu0 0.0
  %376 = vmatmul.mubr.f32.gmra.mrb[0].mxu0 %v288
  %v377 = vpop.f32.mrb[0].mxu0
  %v378 = vadd.f32 %v249, %v377
  %v379 = vpop.f32.mrb[0].mxu0
  %380 = vmatprep.mubr.f32.mxu0 0.0
  %381 = vmatmul.mubr.f32.gmra.mrb[0].mxu0 %v291
  %v382 = vpop.f32.mrb[0].mxu0
  %v383 = vadd.f32 %v254, %v382
  %v384 = vpop.f32.mrb[0].mxu0
  %385 = vmatprep.mubr.f32.mxu0 0.0
  %386 = vmatmul.mubr.f32.gmra.mrb[0].mxu0 %v294
  %v387 = vpop.f32.mrb[0].mxu0
  %v388 = vadd.f32 %v259, %v387
  %v389 = vpop.f32.mrb[0].mxu0
  %390 = vmatprep.mubr.f32.mxu0 0.0
  %391 = vmatmul.mubr.f32.gmra.mrb[0].mxu0 %v297
  %v392 = vpop.f32.mrb[0].mxu0
  %v393 = vadd.f32 %v264, %v392
  %v394 = vpop.f32.mrb[0].mxu0
  %395 = vmatprep.mubr.f32.mxu0 0.0
  %396 = vmatmul.mubr.f32.gmra.mrb[0].mxu0 %v300
  %v397 = vpop.f32.mrb[0].mxu0
  %v398 = vadd.f32 %v269, %v397
  %v399 = vpop.f32.mrb[0].mxu0
  %400 = vmatprep.mubr.f32.mxu0 0.0
  %401 = vmatmul.mubr.f32.gmra.mrb[0].mxu0 %v303
  %v402 = vpop.f32.mrb[0].mxu0
  %v403 = vadd.f32 %v274, %v402
  %v404 = vpop.f32.mrb[0].mxu0
  %405 = vmatprep.mubr.f32.mxu0 0.0
  %406 = vmatmul.mubr.f32.gmra.mrb[0].mxu0 %v306
  %v407 = vpop.f32.mrb[0].mxu0
  %v408 = vadd.f32 %v279, %v407
  %v409 = vpop.f32.mrb[0].mxu0
  %410 = vmatprep.mubr.f32.mxu0 0.0
  %411 = vmatmul.mubr.f32.gmra.mrb[0].mxu0 %v309
  %v412 = vpop.f32.mrb[0].mxu0
  %v413 = vadd.f32 %v284, %v412
  %v414 = vpop.f32.mrb[0].mxu0
  %415 = vdwg.mxu0
  %v416 = vmul.f32 %v378, 0.01
  %v417 = vmul.f32 %v383, 0.01
  %v418 = vmul.f32 %v388, 0.01
  %v419 = vmul.f32 %v393, 0.01
  %v420 = vmul.f32 %v398, 0.01
  %v421 = vmul.f32 %v403, 0.01
  %v422 = vmul.f32 %v408, 0.01
  %v423 = vmul.f32 %v413, 0.01
  %v424 = vmax.f32 %v378, %v416
  %v425 = vmax.f32 %v383, %v417
  %v426 = vmax.f32 %v388, %v418
  %v427 = vmax.f32 %v393, %v419
  %v428 = vmax.f32 %v398, %v420
  %v429 = vmax.f32 %v403, %v421
  %v430 = vmax.f32 %v408, %v422
  %v431 = vmax.f32 %v413, %v423
  %v432 = vld [vmem:[%s5] sm:$0x3]
  %v433 = vld [vmem:[%s6] sm:$0x3]
  %435 = vset.pattern.permute.xlu0 0
  %436 = vperm.xlu0 %435, %v433
  %v437 = vpop.permute.xlu0 %436
  %v440 = vsel %vm286, %v432, 0
  %442 = vmatprep.subr.mxu0 0.0
  %443 = vmatpush1.msra.mxu0 %v424
  %444 = vmatprep.subr.mxu0 0.0
  %445 = vmatpush1.msra.mxu0 %v425
  %446 = vmatprep.subr.mxu0 0.0
  %447 = vmatpush1.msra.mxu0 %v426
  %448 = vmatprep.subr.mxu0 0.0
  %449 = vmatpush1.msra.mxu0 %v427
  %450 = vmatprep.subr.mxu0 0.0
  %451 = vmatpush1.msra.mxu0 %v428
  %452 = vmatprep.subr.mxu0 0.0
  %453 = vmatpush1.msra.mxu0 %v429
  %454 = vmatprep.subr.mxu0 0.0
  %455 = vmatpush1.msra.mxu0 %v430
  %456 = vmatprep.subr.mxu0 0.0
  %457 = vmatpush1.msra.mxu0 %v431
  %458 = vmatprep.subr.mxu0 0.0
  %459 = vmatpush1.msra.mxu0 0.0
  %460 = vmatprep.subr.mxu0 0.0
  %461 = vmatpush1.msra.mxu0 0.0
  %462 = vmatprep.subr.mxu0 0.0
  %463 = vmatpush1.msra.mxu0 0.0
  %464 = vmatprep.subr.mxu0 0.0
  %465 = vmatpush1.msra.mxu0 0.0
  %466 = vmatprep.subr.mxu0 0.0
  %467 = vmatpush1.msra.mxu0 0.0
  %468 = vmatprep.subr.mxu0 0.0
  %469 = vmatpush1.msra.mxu0 0.0
  %470 = vmatprep.subr.mxu0 0.0
  %471 = vmatpush1.msra.mxu0 0.0
  %472 = vmatprep.subr.mxu0 0.0
  %473 = vmatpush1.msra.mxu0 0.0
  %474 = vmatprep.subr.mxu0 0.0
  %475 = vmatpush1.msra.mxu0 0.0
  %476 = vmatprep.subr.mxu0 0.0
  %477 = vmatpush1.msra.mxu0 0.0
  %478 = vmatprep.subr.mxu0 0.0
  %479 = vmatpush1.msra.mxu0 0.0
  %480 = vmatprep.subr.mxu0 0.0
  %481 = vmatpush1.msra.mxu0 0.0
  %482 = vmatprep.subr.mxu0 0.0
  %483 = vmatpush1.msra.mxu0 0.0
  %484 = vmatprep.subr.mxu0 0.0
  %485 = vmatpush1.msra.mxu0 0.0
  %486 = vmatprep.subr.mxu0 0.0
  %487 = vmatpush1.msra.mxu0 0.0
  %488 = vmatprep.subr.mxu0 0.0
  %489 = vmatpush1.msra.mxu0 0.0
  %490 = vmatprep.subr.mxu0 0.0
  %491 = vmatpush1.msra.mxu0 0.0
  %492 = vmatprep.subr.mxu0 0.0
  %493 = vmatpush1.msra.mxu0 0.0
  %494 = vmatprep.subr.mxu0 0.0
  %495 = vmatpush1.msra.mxu0 0.0
  %496 = vmatprep.subr.mxu0 0.0
  %497 = vmatpush1.msra.mxu0 0.0
  %498 = vmatprep.subr.mxu0 0.0
  %499 = vmatpush1.msra.mxu0 0.0
  %500 = vmatprep.subr.mxu0 0.0
  %501 = vmatpush1.msra.mxu0 0.0
  %502 = vmatprep.subr.mxu0 0.0
  %503 = vmatpush1.msra.mxu0 0.0
  %504 = vmatprep.subr.mxu0 0.0
  %505 = vmatpush1.msra.mxu0 0.0
  %506 = vmatprep.mubr.f32.mxu0 0.0
  %507 = vmatmul.mubr.f32.gmra.mrb[0].mxu0 %v440
  %v508 = vpop.f32.mrb[0].mxu0
  %v509 = vadd.f32 %v437, %v508
  %v510 = vpop.f32.mrb[0].mxu0
  %511 = vdwg.mxu0
  %512 = vst [vmem:[%s7] sm:$0x3] %v509
  // Predicated region
  $region30: #{double_critic_forward.1} parent=0 // pred_check
    _
  $region31: #{double_critic_forward.1} parent=0 // pred_check_branch
    %514 = sbr.rel (0) target = $region33
  $region32: #{double_critic_forward.1} parent=0 // pred_region
    _
  $region33: #{double_critic_forward.1} parent=0 // pred_fallthru
    _
  // Predicated region
  $region34: #{double_critic_forward.1} parent=0 // pred_check
    _
  $region35: #{double_critic_forward.1} parent=0 // pred_check_branch
    %516 = sbr.rel (0) target = $region37
  $region36: #{double_critic_forward.1} parent=0 // pred_region
    _
  $region37: #{double_critic_forward.1} parent=0 // pred_fallthru
    _

</llo_original>
